<compile_context>
chip_gen: v7x
topology: tpu7x:2x2x1
jax: 0.10.0
libtpu: 0.0.40
codegen_flags: <defaults>
</compile_context>

<pallas_src>
import functools
from itertools import combinations

import jax
import jax.numpy as jnp
from jax.experimental import pallas as pl
from jax.experimental.pallas import tpu as pltpu


def _ipn_kernel(xt_ref, out_ref, *, pairs, num_fields):
    # xt_ref: (F, D, TB)  field-major, batch on the lane axis
    # out_ref: (P, TB)
    # Load each field slab once; compute in f32 for exact accumulation.
    fields = [xt_ref[f].astype(jnp.float32) for f in range(num_fields)]   # (D, TB) each
    # Per pair: VPU elementwise multiply + sublane reduction over D.
    rows = [
        jnp.sum(fields[i] * fields[j], axis=0, keepdims=True)            # (1, TB)
        for (i, j) in pairs
    ]
    # Assemble the (P, TB) block and do one lane-dense store.
    out_ref[...] = jnp.concatenate(rows, axis=0).astype(out_ref.dtype)


def inner_product_network_loop(x, num_fields, *, block_batch=None):
    """Pallas TPU implementation of InnerProductNetworkLoop.forward."""
    B, F, D = x.shape
    assert F == num_fields
    pairs = list(combinations(range(F), 2))   # (0,1),(0,2),... == torch loop order
    P = len(pairs)

    # Layout plumbing: put batch on the minor (lane) axis for the kernel.
    xt = jnp.transpose(x, (1, 2, 0))          # (F, D, B)

    if block_batch is None:
        # Big batches: 512-wide lane tiles (multiple of 128); toy batches: one tile.
        block_batch = 512 if B >= 512 else B
    TB = min(block_batch, B)
    grid = (pl.cdiv(B, TB),)

    kernel = functools.partial(_ipn_kernel, pairs=pairs, num_fields=F)

    out_t = pl.pallas_call(
        kernel,
        out_shape=jax.ShapeDtypeStruct((P, B), x.dtype),
        grid=grid,
        in_specs=[pl.BlockSpec((F, D, TB), lambda b: (0, 0, b))],
        out_specs=pl.BlockSpec((P, TB), lambda b: (0, b)),
        compiler_params=pltpu.CompilerParams(
            dimension_semantics=("parallel",),     # batch tiles are independent
            vmem_limit_bytes=32 * 1024 * 1024,     # safe on v5e/v6e/v7x
        ),
    )(xt)
    return out_t.T                                  # (B, P), torch pair order


def _reference(x, num_fields):
    pairs = list(combinations(range(num_fields), 2))
    row = jnp.array([i for i, _ in pairs])
    col = jnp.array([j for _, j in pairs])
    return jnp.sum(x[:, row] * x[:, col], axis=2)


if __name__ == "__main__":
    batch, num_fields, embed_dim = 2, 4, 16
    key = jax.random.PRNGKey(0)
    x = jax.random.normal(key, (batch, num_fields, embed_dim), dtype=jnp.float32)

    out = inner_product_network_loop(x, num_fields)
    out = jax.block_until_ready(out)

    ref = _reference(x, num_fields)
    assert out.shape == ref.shape == (batch, num_fields * (num_fields - 1) // 2)
    assert jnp.allclose(out, ref, atol=1e-5, rtol=1e-5), (out, ref)
    print("KERNEL_OK")
</pallas_src>

<mosaic_0001>
module attributes {stable_mosaic.version = 11 : i64} {
  func.func @_ipn_kernel(%arg0: i32, %arg1: memref<4x16x2xf32, #tpu.memory_space<vmem>>, %arg2: memref<6x2xf32, #tpu.memory_space<vmem>>) attributes {dimension_semantics = [#tpu.dimension_semantics<parallel>], iteration_bounds = array<i64: 1>, scalar_prefetch = 0 : i64, scratch_operands = 0 : i64, tpu.core_type = #tpu.core_type<tc>, window_params = [{transform_indices = @transform_0, window_bounds = array<i64: 4, 16, 2>}, {transform_indices = @transform_1, window_bounds = array<i64: 6, 2>}]} {
    %c0 = arith.constant 0 : index
    %c0_0 = arith.constant 0 : index
    %c0_1 = arith.constant 0 : index
    %0 = vector.load %arg1[%c0, %c0_0, %c0_1] : memref<4x16x2xf32, #tpu.memory_space<vmem>>, vector<1x16x2xf32>
    %1 = vector.shape_cast %0 : vector<1x16x2xf32> to vector<16x2xf32>
    %c1 = arith.constant 1 : index
    %c0_2 = arith.constant 0 : index
    %c0_3 = arith.constant 0 : index
    %2 = vector.load %arg1[%c1, %c0_2, %c0_3] : memref<4x16x2xf32, #tpu.memory_space<vmem>>, vector<1x16x2xf32>
    %3 = vector.shape_cast %2 : vector<1x16x2xf32> to vector<16x2xf32>
    %c2 = arith.constant 2 : index
    %c0_4 = arith.constant 0 : index
    %c0_5 = arith.constant 0 : index
    %4 = vector.load %arg1[%c2, %c0_4, %c0_5] : memref<4x16x2xf32, #tpu.memory_space<vmem>>, vector<1x16x2xf32>
    %5 = vector.shape_cast %4 : vector<1x16x2xf32> to vector<16x2xf32>
    %c3 = arith.constant 3 : index
    %c0_6 = arith.constant 0 : index
    %c0_7 = arith.constant 0 : index
    %6 = vector.load %arg1[%c3, %c0_6, %c0_7] : memref<4x16x2xf32, #tpu.memory_space<vmem>>, vector<1x16x2xf32>
    %7 = vector.shape_cast %6 : vector<1x16x2xf32> to vector<16x2xf32>
    %8 = arith.mulf %1, %3 : vector<16x2xf32>
    %cst = arith.constant dense<0.000000e+00> : vector<2xf32>
    %9 = vector.multi_reduction <add>, %8, %cst [0] : vector<16x2xf32> to vector<2xf32>
    %10 = vector.shape_cast %9 : vector<2xf32> to vector<1x2xf32>
    %11 = arith.mulf %1, %5 : vector<16x2xf32>
    %cst_8 = arith.constant dense<0.000000e+00> : vector<2xf32>
    %12 = vector.multi_reduction <add>, %11, %cst_8 [0] : vector<16x2xf32> to vector<2xf32>
    %13 = vector.shape_cast %12 : vector<2xf32> to vector<1x2xf32>
    %14 = arith.mulf %1, %7 : vector<16x2xf32>
    %cst_9 = arith.constant dense<0.000000e+00> : vector<2xf32>
    %15 = vector.multi_reduction <add>, %14, %cst_9 [0] : vector<16x2xf32> to vector<2xf32>
    %16 = vector.shape_cast %15 : vector<2xf32> to vector<1x2xf32>
    %17 = arith.mulf %3, %5 : vector<16x2xf32>
    %cst_10 = arith.constant dense<0.000000e+00> : vector<2xf32>
    %18 = vector.multi_reduction <add>, %17, %cst_10 [0] : vector<16x2xf32> to vector<2xf32>
    %19 = vector.shape_cast %18 : vector<2xf32> to vector<1x2xf32>
    %20 = arith.mulf %3, %7 : vector<16x2xf32>
    %cst_11 = arith.constant dense<0.000000e+00> : vector<2xf32>
    %21 = vector.multi_reduction <add>, %20, %cst_11 [0] : vector<16x2xf32> to vector<2xf32>
    %22 = vector.shape_cast %21 : vector<2xf32> to vector<1x2xf32>
    %23 = arith.mulf %5, %7 : vector<16x2xf32>
    %cst_12 = arith.constant dense<0.000000e+00> : vector<2xf32>
    %24 = vector.multi_reduction <add>, %23, %cst_12 [0] : vector<16x2xf32> to vector<2xf32>
    %25 = vector.shape_cast %24 : vector<2xf32> to vector<1x2xf32>
    %26 = tpu.concatenate %10, %13, %16, %19, %22, %25 in 0 : vector<1x2xf32>, vector<1x2xf32>, vector<1x2xf32>, vector<1x2xf32>, vector<1x2xf32>, vector<1x2xf32> -> vector<6x2xf32>
    %c0_13 = arith.constant 0 : index
    %c0_14 = arith.constant 0 : index
    %27 = vector.load %arg2[%c0_13, %c0_14] : memref<6x2xf32, #tpu.memory_space<vmem>>, vector<6x2xf32>
    tpu.vector_store %arg2[%c0_13, %c0_14], %26 {strides = array<i32>} : memref<6x2xf32, #tpu.memory_space<vmem>>, vector<6x2xf32>,
    return
  }
  func.func @transform_0(%arg0: i32) -> (i32, i32, i32) {
    %c0_i32 = arith.constant 0 : i32
    %c0_i32_0 = arith.constant 0 : i32
    %c0_i32_1 = arith.constant 0 : i32
    return %c0_i32, %c0_i32_0, %arg0 : i32, i32, i32
  }
  func.func @transform_1(%arg0: i32) -> (i32, i32) {
    %c0_i32 = arith.constant 0 : i32
    %c0_i32_0 = arith.constant 0 : i32
    return %c0_i32, %arg0 : i32, i32
  }
}

</mosaic_0001>

<llo_original>
// kernel: tpu_custom_call.1
$region0: #{tpu_custom_call.1}
  #allocation0 [shape = 'u32[]', space=smem, size = 0x4, offset = 0x4, fixed_abs, tag = 'smem constant byte address 0x4 - core index']
  #allocation1 [shape = 'u32[144,128]{1,0:T(1,128)}', space=vmem, size = 0x12000, scoped, tag = 'internal scratch']
  %s0 = inlined_call_operand.vmem [shape: f32[4,16,2], index: 0, kind: input, shape index: {}]
  %s1 = inlined_call_operand.vmem [shape: f32[6,2], index: 1, kind: output, shape index: {}]
  %s2 = sld [smem:[#allocation0]]
  $region14: #{tpu_custom_call.1} parent=0
    _
  %s4 = ssub.s32 1, %s2
  %s5 = scalar_select 0, %s4, %s2
  // Predicated region
  $region2: #{tpu_custom_call.1} parent=0 // pred_check
    _
  $region3: #{tpu_custom_call.1} parent=0 // pred_check_branch
    %7 = sbr.rel (0) target = $region5
  $region4: #{tpu_custom_call.1} parent=0 // pred_region
    _
  $region5: #{tpu_custom_call.1} parent=0 // pred_fallthru
    _
  %v8 = vld [vmem:[%s0] sm:$0xff]
  %v9 = vld [vmem:[%s0 + $0x8] sm:$0xff]
  %s10 = scalar_lea.vmem %s0, 16
  %v11 = vld [vmem:[%s10] sm:$0xff]
  %v12 = vld [vmem:[%s10 + $0x8] sm:$0xff]
  %s13 = scalar_lea.vmem %s0, 32
  %v14 = vld [vmem:[%s13] sm:$0xff]
  %v15 = vld [vmem:[%s13 + $0x8] sm:$0xff]
  %s16 = scalar_lea.vmem %s0, 48
  %v17 = vld [vmem:[%s16] sm:$0xff]
  %v18 = vld [vmem:[%s16 + $0x8] sm:$0xff]
  %v19 = vmul.f32 %v8, %v11
  %v20 = vmul.f32 %v9, %v12
  %vm21 = vcmask 15360
  %v22 = vsel %vm21, %v19, 0.0
  %v23 = vsel %vm21, %v20, 0.0
  %v24 = vadd.f32 %v22, %v23
  %v25 = vrot.slane %v24, 4
  %v26 = vadd.f32 %v24, %v25
  %v27 = vrot.slane %v26, 2
  %v28 = vadd.f32 %v26, %v27
  %v29 = vrot.slane %v28, 1
  %v30 = vadd.f32 %v28, %v29
  %v31 = vmul.f32 %v8, %v14
  %v32 = vmul.f32 %v9, %v15
  %v33 = vsel %vm21, %v31, 0.0
  %v34 = vsel %vm21, %v32, 0.0
  %v35 = vadd.f32 %v33, %v34
  %v36 = vrot.slane %v35, 4
  %v37 = vadd.f32 %v35, %v36
  %v38 = vrot.slane %v37, 2
  %v39 = vadd.f32 %v37, %v38
  %v40 = vrot.slane %v39, 1
  %v41 = vadd.f32 %v39, %v40
  %v42 = vmul.f32 %v8, %v17
  %v43 = vmul.f32 %v9, %v18
  %v44 = vsel %vm21, %v42, 0.0
  %v45 = vsel %vm21, %v43, 0.0
  %v46 = vadd.f32 %v44, %v45
  %v47 = vrot.slane %v46, 4
  %v48 = vadd.f32 %v46, %v47
  %v49 = vrot.slane %v48, 2
  %v50 = vadd.f32 %v48, %v49
  %v51 = vrot.slane %v50, 1
  %v52 = vadd.f32 %v50, %v51
  %v53 = vmul.f32 %v11, %v14
  %v54 = vmul.f32 %v12, %v15
  %v55 = vsel %vm21, %v53, 0.0
  %v56 = vsel %vm21, %v54, 0.0
  %v57 = vadd.f32 %v55, %v56
  %v58 = vrot.slane %v57, 4
  %v59 = vadd.f32 %v57, %v58
  %v60 = vrot.slane %v59, 2
  %v61 = vadd.f32 %v59, %v60
  %v62 = vrot.slane %v61, 1
  %v63 = vadd.f32 %v61, %v62
  %v64 = vmul.f32 %v11, %v17
  %v65 = vmul.f32 %v12, %v18
  %v66 = vsel %vm21, %v64, 0.0
  %v67 = vsel %vm21, %v65, 0.0
  %v68 = vadd.f32 %v66, %v67
  %v69 = vrot.slane %v68, 4
  %v70 = vadd.f32 %v68, %v69
  %v71 = vrot.slane %v70, 2
  %v72 = vadd.f32 %v70, %v71
  %v73 = vrot.slane %v72, 1
  %v74 = vadd.f32 %v72, %v73
  %v75 = vmul.f32 %v14, %v17
  %v76 = vmul.f32 %v15, %v18
  %v77 = vsel %vm21, %v75, 0.0
  %v78 = vsel %vm21, %v76, 0.0
  %v79 = vadd.f32 %v77, %v78
  %v80 = vrot.slane %v79, 4
  %v81 = vadd.f32 %v79, %v80
  %v82 = vrot.slane %v81, 2
  %v83 = vadd.f32 %v81, %v82
  %v84 = vrot.slane %v83, 1
  %v85 = vadd.f32 %v83, %v84
  %vm86 = vcmask 1040384
  %v87 = vsel %vm86, %v30, %v41
  %vm88 = vcmask 1041408
  %v89 = vsel %vm88, %v87, %v52
  %vm90 = vcmask 1042432
  %v91 = vsel %vm90, %v89, %v63
  %vm92 = vcmask 1043456
  %v93 = vsel %vm92, %v91, %v74
  %vm94 = vcmask 1044480
  %v95 = vsel %vm94, %v93, %v85
  %vm96 = vcmask 13312
  %97 = vst.msk [vmem:[%s1] sm:$0x3f] %vm96, %v95
  // Predicated region
  $region6: #{tpu_custom_call.1} parent=0 // pred_check
    _
  $region7: #{tpu_custom_call.1} parent=0 // pred_check_branch
    %99 = sbr.rel (0) target = $region9
  $region8: #{tpu_custom_call.1} parent=0 // pred_region
    _
  $region9: #{tpu_custom_call.1} parent=0 // pred_fallthru
    _
  // Predicated region
  $region10: #{tpu_custom_call.1} parent=0 // pred_check
    _
  $region11: #{tpu_custom_call.1} parent=0 // pred_check_branch
    %101 = sbr.rel (0) target = $region13
  $region12: #{tpu_custom_call.1} parent=0 // pred_region
    _
  $region13: #{tpu_custom_call.1} parent=0 // pred_fallthru
    _

</llo_original>
